<compile_context>
chip_gen: v7x
topology: tpu7x:2x2x1
jax: 0.10.0
libtpu: 0.0.40
codegen_flags: <defaults>
</compile_context>

<pallas_src>
import jax
import jax.numpy as jnp
from jax.experimental import pallas as pl
from jax.experimental.pallas import tpu as pltpu


def _round_up(v, m):
    return ((v + m - 1) // m) * m


# ---------------------------------------------------------------------------
# Small / single-tile path: whole problem in one kernel invocation.
# ---------------------------------------------------------------------------
def _small_linear_kernel(x_ref, wt_ref, a_ref, o_ref):
    # (M,K) @ ((K,N) + (1,N)) -> (M,N); K on sublanes, N on lanes (MXU-native).
    o_ref[...] = jnp.dot(
        x_ref[...], wt_ref[...] + a_ref[...],
        preferred_element_type=jnp.float32,
    )


def _small_linear(x, wt, a_row):
    M, K = x.shape
    _, N = wt.shape
    # Pad only to the minimal vreg alignment (8 sublanes / 128 lanes).
    Mp, Kp, Np = _round_up(M, 8), _round_up(K, 128), _round_up(N, 128)
    if (Mp, Kp) != (M, K):
        x = jnp.pad(x, ((0, Mp - M), (0, Kp - K)))
    if (Kp, Np) != (K, N):
        wt = jnp.pad(wt, ((0, Kp - K), (0, Np - N)))
    if Np != N:
        a_row = jnp.pad(a_row, ((0, 0), (0, Np - N)))

    out = pl.pallas_call(
        _small_linear_kernel,
        out_shape=jax.ShapeDtypeStruct((Mp, Np), jnp.float32),
        in_specs=[pl.BlockSpec(memory_space=pltpu.MemorySpace.VMEM)] * 3,
        out_specs=pl.BlockSpec(memory_space=pltpu.MemorySpace.VMEM),
    )(x, wt, a_row)

    if (Mp, Np) != (M, N):
        out = out[:M, :N]
    return out


# ---------------------------------------------------------------------------
# General tiled path: K-reduction GEMM, accumulate directly into o_ref.
# ---------------------------------------------------------------------------
def _tiled_linear_kernel(x_ref, wt_ref, a_ref, o_ref, rowsum_ref):
    k = pl.program_id(2)

    @pl.when(k == 0)
    def _():
        o_ref[...] = jnp.zeros_like(o_ref)
        rowsum_ref[...] = jnp.zeros_like(rowsum_ref)

    x = x_ref[...]
    # MXU partial product accumulated into the resident f32 output tile
    # (output index_map ignores k -> no separate accumulator scratch needed).
    o_ref[...] += jnp.dot(x, wt_ref[...], preferred_element_type=jnp.float32)
    # Rank-1 identity: track rowsum_K(x) instead of adding `a` to every
    # (tk,tn) weight tile each step; correction is applied once at the end.
    rowsum_ref[...] += jnp.sum(x.astype(jnp.float32), axis=1, keepdims=True)

    @pl.when(k == pl.num_programs(2) - 1)
    def _():
        o_ref[...] += rowsum_ref[...] * a_ref[...]


def _tiled_linear(x, wt, a_row, *, tm, tn, tk, cast_to_bf16):
    M, K = x.shape
    _, N = wt.shape

    m_align = 16 if cast_to_bf16 else 8
    tm = _round_up(max(m_align, min(tm, _round_up(M, m_align))), m_align)
    tn = _round_up(max(128, min(tn, _round_up(N, 128))), 128)
    tk = _round_up(max(128, min(tk, _round_up(K, 128))), 128)

    Mp = _round_up(M, tm)
    # Megacore / dual-TC: with a single i tile, expose >= 2 j tiles when it
    # costs no extra padding, so both cores get work.
    if Mp == tm:
        n_ceil = _round_up(N, 128)
        if _round_up(N, tn) == tn and n_ceil >= 256 and n_ceil % 256 == 0:
            tn = n_ceil // 2
    Np = _round_up(N, tn)
    Kp = _round_up(K, tk)

    if cast_to_bf16:
        # bf16 inputs, f32 accumulation; the rank-1 correction stays in f32.
        x = x.astype(jnp.bfloat16)
        wt = wt.astype(jnp.bfloat16)

    # Pad only ragged edges; skip entirely when already aligned.
    if (Mp, Kp) != (M, K):
        x = jnp.pad(x, ((0, Mp - M), (0, Kp - K)))
    if (Kp, Np) != (K, N):
        wt = jnp.pad(wt, ((0, Kp - K), (0, Np - N)))
    if Np != N:
        a_row = jnp.pad(a_row, ((0, 0), (0, Np - N)))

    grid = (Mp // tm, Np // tn, Kp // tk)

    # Weight tile spec; in the GEMV-like regime try a third buffer to hide DMA
    # issue latency (weight streaming is the sole HBM bottleneck there).
    wt_spec = pl.BlockSpec((tk, tn), lambda i, j, k: (k, j))
    if grid[0] == 1 and grid[2] > 1:
        try:
            wt_spec = pl.BlockSpec((tk, tn), lambda i, j, k: (k, j),
                                   pipeline_mode=pl.Buffered(3))
        except Exception:
            pass  # fall back to default double buffering

    # VMEM budget from the actual tile footprint (+ headroom), capped well
    # below v7x's 64 MiB physical VMEM.
    vmem_bytes = 4 * (2 * tm * tk + 3 * tk * tn + 2 * tm * tn + 2 * tn + tm)
    vmem_bytes = min(max(vmem_bytes + (4 << 20), 16 << 20), 48 << 20)

    out = pl.pallas_call(
        _tiled_linear_kernel,
        out_shape=jax.ShapeDtypeStruct((Mp, Np), jnp.float32),
        grid_spec=pltpu.PrefetchScalarGridSpec(
            num_scalar_prefetch=0,
            grid=grid,
            in_specs=[
                pl.BlockSpec((tm, tk), lambda i, j, k: (i, k)),  # x tile
                wt_spec,                                         # W^T tile (K,N)
                pl.BlockSpec((1, tn), lambda i, j, k: (0, j)),   # addition row
            ],
            out_specs=pl.BlockSpec((tm, tn), lambda i, j, k: (i, j)),
            scratch_shapes=[pltpu.VMEM((tm, 1), jnp.float32)],
        ),
        compiler_params=pltpu.CompilerParams(
            dimension_semantics=("parallel", "parallel", "arbitrary"),
            vmem_limit_bytes=vmem_bytes,
        ),
    )(x, wt, a_row)

    if (Mp, Np) != (M, N):
        out = out[:M, :N]
    return out


def model_forward(x1, weight, addition_weight, *, tm=512, tn=512, tk=512,
                  cast_to_bf16=False):
    """y = F.linear(x1, weight + addition_weight[:, None]) = x1 @ (W + a·1^T)^T."""
    M, K = x1.shape
    N, K2 = weight.shape
    assert K == K2
    assert addition_weight.shape == (N,)

    x = x1.astype(jnp.float32)
    wt = weight.astype(jnp.float32).T            # (K, N): MXU-native RHS layout
    a_row = addition_weight.astype(jnp.float32).reshape(1, N)

    # Sub-tile problems: single kernel invocation, no K loop, minimal padding.
    if M <= 512 and N <= 1024 and K <= 1024:
        return _small_linear(x, wt, a_row)

    return _tiled_linear(x, wt, a_row, tm=tm, tn=tn, tk=tk,
                         cast_to_bf16=cast_to_bf16)


if __name__ == "__main__":
    key = jax.random.PRNGKey(0)
    k_x, k_w, k_x2, k_w2, k_a2 = jax.random.split(key, 5)

    # --- Module config: Linear(3, 4) -> weight (4, 3); addition_weight zeros (4,)
    in_features, out_features, batch = 3, 4, 2
    x1 = jax.random.normal(k_x, (batch, in_features), dtype=jnp.float32)
    bound = 1.0 / jnp.sqrt(in_features)
    weight = jax.random.uniform(
        k_w, (out_features, in_features), dtype=jnp.float32,
        minval=-bound, maxval=bound)
    addition_weight = jnp.zeros((out_features,), dtype=jnp.float32)

    out = model_forward(x1, weight, addition_weight)
    jax.block_until_ready(out)
    ref = x1 @ (weight + addition_weight[:, None]).T
    assert out.shape == (batch, out_features)
    assert jnp.allclose(out, ref, atol=1e-5, rtol=1e-5)

    # --- Also exercise the general tiled path (non-zero addition_weight).
    M2, K2dim, N2 = 20, 1536, 512
    x2 = jax.random.normal(k_x2, (M2, K2dim), dtype=jnp.float32)
    w2 = jax.random.normal(k_w2, (N2, K2dim), dtype=jnp.float32) / jnp.sqrt(K2dim)
    a2 = 0.01 * jax.random.normal(k_a2, (N2,), dtype=jnp.float32)
    out2 = model_forward(x2, w2, a2)
    jax.block_until_ready(out2)
    ref2 = x2 @ (w2 + a2[:, None]).T
    assert out2.shape == (M2, N2)
    assert jnp.allclose(out2, ref2, atol=1e-3, rtol=1e-3)

    print("KERNEL_OK")
</pallas_src>

<mosaic_0001>
module attributes {stable_mosaic.version = 11 : i64} {
  func.func @_small_linear_kernel(%arg0: memref<8x128xf32, #tpu.memory_space<vmem>>, %arg1: memref<128x128xf32, #tpu.memory_space<vmem>>, %arg2: memref<1x128xf32, #tpu.memory_space<vmem>>, %arg3: memref<8x128xf32, #tpu.memory_space<vmem>>) attributes {dimension_semantics = [], scalar_prefetch = 0 : i64, scratch_operands = 0 : i64, tpu.core_type = #tpu.core_type<tc>} {
    %c0 = arith.constant 0 : index
    %c0_0 = arith.constant 0 : index
    %0 = vector.load %arg0[%c0, %c0_0] : memref<8x128xf32, #tpu.memory_space<vmem>>, vector<8x128xf32>
    %c0_1 = arith.constant 0 : index
    %c0_2 = arith.constant 0 : index
    %1 = vector.load %arg1[%c0_1, %c0_2] : memref<128x128xf32, #tpu.memory_space<vmem>>, vector<128x128xf32>
    %c0_3 = arith.constant 0 : index
    %c0_4 = arith.constant 0 : index
    %2 = vector.load %arg2[%c0_3, %c0_4] : memref<1x128xf32, #tpu.memory_space<vmem>>, vector<1x128xf32>
    %3 = vector.broadcast %2 : vector<1x128xf32> to vector<128x128xf32>
    %4 = arith.addf %1, %3 : vector<128x128xf32>
    %cst = arith.constant dense<0.000000e+00> : vector<8x128xf32>
    %5 = tpu.matmul %0, %4, %cst {dimension_numbers = #tpu.dot_dimension_numbers<[1], [0], [0], [1], [0, 0, 1, 1], [], []>} : vector<8x128xf32>, vector<128x128xf32>, vector<8x128xf32> -> vector<8x128xf32>
    %c0_5 = arith.constant 0 : index
    %c0_6 = arith.constant 0 : index
    %6 = vector.load %arg3[%c0_5, %c0_6] : memref<8x128xf32, #tpu.memory_space<vmem>>, vector<8x128xf32>
    tpu.vector_store %arg3[%c0_5, %c0_6], %5 {strides = array<i32>} : memref<8x128xf32, #tpu.memory_space<vmem>>, vector<8x128xf32>,
    return
  }
}

</mosaic_0001>

<llo_original>
// kernel: tpu_custom_call.1
$region0: #{tpu_custom_call.1}
  #allocation0 [shape = 'u32[]', space=smem, size = 0x4, offset = 0x4, fixed_abs, tag = 'smem constant byte address 0x4 - core index']
  #allocation1 [shape = 'u32[144,128]{1,0:T(1,128)}', space=vmem, size = 0x12000, scoped, tag = 'internal scratch']
  %s0 = inlined_call_operand.hbm [shape: f32[8,128], index: 0, kind: input, shape index: {}]
  %s1 = inlined_call_operand.hbm [shape: f32[128,128], index: 1, kind: input, shape index: {}]
  %s2 = inlined_call_operand.vmem [shape: f32[1,128], index: 2, kind: input, shape index: {}]
  %s3 = inlined_call_operand.hbm [shape: f32[8,128], index: 3, kind: output, shape index: {}]
  %s4 = sld [smem:[#allocation0]]
  $region30: #{tpu_custom_call.1} parent=0
    _
  %s6 = ssub.s32 1, %s4
  %s7 = scalar_select 0, %s6, %s4
  $region1: #{tpu_custom_call.1} parent=0
    #allocation2 [shape = 'u8[4096]{0}', space=vmem, size = 0x1000, scoped, tag = 'input window, operand 0, single buffered']
    #allocation3 [shape = 's32[1]{0}', space=sflag, size = 0x4, scoped, tag = 'scoped memory for tpu_custom_call.1']
    #allocation4 [shape = 's32[1]{0}', space=sflag, size = 0x4, scoped, tag = 'scoped memory for tpu_custom_call.1']
    #allocation5 [shape = 'u8[65536]{0}', space=vmem, size = 0x10000, scoped, tag = 'input window, operand 1, single buffered']
    #allocation6 [shape = 's32[1]{0}', space=sflag, size = 0x4, scoped, tag = 'scoped memory for tpu_custom_call.1']
    #allocation7 [shape = 'u8[4096]{0}', space=vmem, size = 0x1000, scoped, tag = 'output window, operand 0, single buffered']
    %8 = vsyncpa [#allocation3], 0
    %9 = vsyncpa [#allocation6], 0
    %10 = vsyncpa [#allocation4], 0
    // Predicated region
    $region2: #{tpu_custom_call.1} parent=1 // pred_check
      _
    $region3: #{tpu_custom_call.1} parent=1 // pred_check_branch
      %12 = sbr.rel (0) target = $region5
    $region4: #{tpu_custom_call.1} parent=1 // pred_region
      %s14 = ssub.s32 128, 128
      %15 = vsyncadd [#allocation3], %s14
      %s17 = sshll.u32 [#allocation2], 4
      %s18 = int_to_ptr.vmem [resolvable:$true] %s17
      %20 = dma.hbm_to_vmem [thread:$0]  %s0, 128, %s18, [#allocation3]
    $region5: #{tpu_custom_call.1} parent=1 // pred_fallthru
      _
    // Predicated region
    $region6: #{tpu_custom_call.1} parent=1 // pred_check
      _
    $region7: #{tpu_custom_call.1} parent=1 // pred_check_branch
      %22 = sbr.rel (0) target = $region9
    $region8: #{tpu_custom_call.1} parent=1 // pred_region
      %s24 = ssub.s32 2048, 2048
      %25 = vsyncadd [#allocation6], %s24
      %s26 = sshll.u32 [#allocation5], 4
      %s27 = int_to_ptr.vmem [resolvable:$true] %s26
      %32 = dma.hbm_to_vmem [thread:$0]  %s1, 2048, %s27, [#allocation6], 128, 128, 8
    $region9: #{tpu_custom_call.1} parent=1 // pred_fallthru
      _
    // Predicated region
    $region10: #{tpu_custom_call.1} parent=1 // pred_check
      _
    $region11: #{tpu_custom_call.1} parent=1 // pred_check_branch
      %34 = sbr.rel (0) target = $region13
    $region12: #{tpu_custom_call.1} parent=1 // pred_region
      _
    $region13: #{tpu_custom_call.1} parent=1 // pred_fallthru
      _
    // Predicated region
    $region14: #{tpu_custom_call.1} parent=1 // pred_check
      _
    $region15: #{tpu_custom_call.1} parent=1 // pred_check_branch
      %36 = sbr.rel (0) target = $region17
    $region16: #{tpu_custom_call.1} parent=1 // pred_region
      %37 = dma.done [#allocation3], 128
    $region17: #{tpu_custom_call.1} parent=1 // pred_fallthru
      _
    // Predicated region
    $region18: #{tpu_custom_call.1} parent=1 // pred_check
      _
    $region19: #{tpu_custom_call.1} parent=1 // pred_check_branch
      %39 = sbr.rel (0) target = $region21
    $region20: #{tpu_custom_call.1} parent=1 // pred_region
      %40 = dma.done [#allocation6], 2048
    $region21: #{tpu_custom_call.1} parent=1 // pred_fallthru
      _
    %v41 = vld [vmem:[#allocation2] sm:$0xff]
    %v42 = vld [vmem:[#allocation5] sm:$0xff]
    %v43 = vld [vmem:[#allocation5 + $0x8] sm:$0xff]
    %v44 = vld [vmem:[#allocation5 + $0x10] sm:$0xff]
    %v45 = vld [vmem:[#allocation5 + $0x18] sm:$0xff]
    %v46 = vld [vmem:[#allocation5 + $0x20] sm:$0xff]
    %v47 = vld [vmem:[#allocation5 + $0x28] sm:$0xff]
    %v48 = vld [vmem:[#allocation5 + $0x30] sm:$0xff]
    %v49 = vld [vmem:[#allocation5 + $0x38] sm:$0xff]
    %v50 = vld [vmem:[#allocation5 + $0x40] sm:$0xff]
    %v51 = vld [vmem:[#allocation5 + $0x48] sm:$0xff]
    %v52 = vld [vmem:[#allocation5 + $0x50] sm:$0xff]
    %v53 = vld [vmem:[#allocation5 + $0x58] sm:$0xff]
    %v54 = vld [vmem:[#allocation5 + $0x60] sm:$0xff]
    %v55 = vld [vmem:[#allocation5 + $0x68] sm:$0xff]
    %v56 = vld [vmem:[#allocation5 + $0x70] sm:$0xff]
    %v57 = vld [vmem:[#allocation5 + $0x78] sm:$0xff]
    %v58 = vld [vmem:[%s2] sm:$0x1]
    %v60 = vlaneseq
    %v61 = vshrl.u32 %v60, 7
    %v62 = vsub.s32 0, %v61
    %v63 = vrot.slane %v58, %v62
    %v65 = vadd.f32 %v42, %v63
    %v66 = vadd.f32 %v43, %v63
    %v67 = vadd.f32 %v44, %v63
    %v68 = vadd.f32 %v45, %v63
    %v69 = vadd.f32 %v46, %v63
    %v70 = vadd.f32 %v47, %v63
    %v71 = vadd.f32 %v48, %v63
    %v72 = vadd.f32 %v49, %v63
    %v73 = vadd.f32 %v50, %v63
    %v74 = vadd.f32 %v51, %v63
    %v75 = vadd.f32 %v52, %v63
    %v76 = vadd.f32 %v53, %v63
    %v77 = vadd.f32 %v54, %v63
    %v78 = vadd.f32 %v55, %v63
    %v79 = vadd.f32 %v56, %v63
    %v80 = vadd.f32 %v57, %v63
    %81 = vmatprep.subr.mxu0 0.0
    %82 = vmatpush1.msra.mxu0 %v65
    %83 = vmatprep.subr.mxu0 0.0
    %84 = vmatpush1.msra.mxu0 %v66
    %85 = vmatprep.subr.mxu0 0.0
    %86 = vmatpush1.msra.mxu0 %v67
    %87 = vmatprep.subr.mxu0 0.0
    %88 = vmatpush1.msra.mxu0 %v68
    %89 = vmatprep.subr.mxu0 0.0
    %90 = vmatpush1.msra.mxu0 %v69
    %91 = vmatprep.subr.mxu0 0.0
    %92 = vmatpush1.msra.mxu0 %v70
    %93 = vmatprep.subr.mxu0 0.0
    %94 = vmatpush1.msra.mxu0 %v71
    %95 = vmatprep.subr.mxu0 0.0
    %96 = vmatpush1.msra.mxu0 %v72
    %97 = vmatprep.subr.mxu0 0.0
    %98 = vmatpush1.msra.mxu0 %v73
    %99 = vmatprep.subr.mxu0 0.0
    %100 = vmatpush1.msra.mxu0 %v74
    %101 = vmatprep.subr.mxu0 0.0
    %102 = vmatpush1.msra.mxu0 %v75
    %103 = vmatprep.subr.mxu0 0.0
    %104 = vmatpush1.msra.mxu0 %v76
    %105 = vmatprep.subr.mxu0 0.0
    %106 = vmatpush1.msra.mxu0 %v77
    %107 = vmatprep.subr.mxu0 0.0
    %108 = vmatpush1.msra.mxu0 %v78
    %109 = vmatprep.subr.mxu0 0.0
    %110 = vmatpush1.msra.mxu0 %v79
    %111 = vmatprep.subr.mxu0 0.0
    %112 = vmatpush1.msra.mxu0 %v80
    %113 = vmatprep.subr.mxu0 0.0
    %114 = vmatpush1.msra.mxu0 0.0
    %115 = vmatprep.subr.mxu0 0.0
    %116 = vmatpush1.msra.mxu0 0.0
    %117 = vmatprep.subr.mxu0 0.0
    %118 = vmatpush1.msra.mxu0 0.0
    %119 = vmatprep.subr.mxu0 0.0
    %120 = vmatpush1.msra.mxu0 0.0
    %121 = vmatprep.subr.mxu0 0.0
    %122 = vmatpush1.msra.mxu0 0.0
    %123 = vmatprep.subr.mxu0 0.0
    %124 = vmatpush1.msra.mxu0 0.0
    %125 = vmatprep.subr.mxu0 0.0
    %126 = vmatpush1.msra.mxu0 0.0
    %127 = vmatprep.subr.mxu0 0.0
    %128 = vmatpush1.msra.mxu0 0.0
    %129 = vmatprep.subr.mxu0 0.0
    %130 = vmatpush1.msra.mxu0 0.0
    %131 = vmatprep.subr.mxu0 0.0
    %132 = vmatpush1.msra.mxu0 0.0
    %133 = vmatprep.subr.mxu0 0.0
    %134 = vmatpush1.msra.mxu0 0.0
    %135 = vmatprep.subr.mxu0 0.0
    %136 = vmatpush1.msra.mxu0 0.0
    %137 = vmatprep.subr.mxu0 0.0
    %138 = vmatpush1.msra.mxu0 0.0
    %139 = vmatprep.subr.mxu0 0.0
    %140 = vmatpush1.msra.mxu0 0.0
    %141 = vmatprep.subr.mxu0 0.0
    %142 = vmatpush1.msra.mxu0 0.0
    %143 = vmatprep.subr.mxu0 0.0
    %144 = vmatpush1.msra.mxu0 0.0
    %145 = vmatprep.mubr.f32.mxu0 0.0
    %146 = vmatmul.mubr.f32.gmra.mrb[0].mxu0 %v41
    %v147 = vpop.f32.mrb[0].mxu0
    %v148 = vadd.f32 0.0, %v147
    %v149 = vpop.f32.mrb[0].mxu0
    %150 = vdwg.mxu0
    %151 = vst [vmem:[#allocation7] sm:$0xff] %v148
    // Predicated region
    $region22: #{tpu_custom_call.1} parent=1 // pred_check
      _
    $region23: #{tpu_custom_call.1} parent=1 // pred_check_branch
      %153 = sbr.rel (0) target = $region25
    $region24: #{tpu_custom_call.1} parent=1 // pred_region
      %s155 = ssub.s32 128, 128
      %156 = vsyncadd [#allocation4], %s155
      %s158 = sshll.u32 [#allocation7], 4
      %s159 = int_to_ptr.vmem [resolvable:$true] %s158
      %161 = dma.vmem_to_hbm [thread:$0]  %s159, 128, %s3, [#allocation4]
    $region25: #{tpu_custom_call.1} parent=1 // pred_fallthru
      _
    // Predicated region
    $region26: #{tpu_custom_call.1} parent=1 // pred_check
      _
    $region27: #{tpu_custom_call.1} parent=1 // pred_check_branch
      %163 = sbr.rel (0) target = $region29
    $region28: #{tpu_custom_call.1} parent=1 // pred_region
      %164 = dma.done [#allocation4], 128
    $region29: #{tpu_custom_call.1} parent=1 // pred_fallthru
      _
    %165 = vsyncpa [#allocation3], 1
    %166 = vsyncpa [#allocation6], 1
    %167 = vsyncpa [#allocation4], 1

</llo_original>
